<compile_context>
chip_gen: v6e
topology: v6e:2x2x1
jax: 0.10.0
libtpu: 0.0.40
codegen_flags: <defaults>
</compile_context>

<pallas_src>
import jax
import jax.numpy as jnp
from jax.experimental import pallas as pl
from jax.experimental.pallas import tpu as pltpu


def _round_up(x, m):
    return (x + m - 1) // m * m


def _reghead_kernel(x_ref, w_ref, bmu_ref, bh_ref, w2_ref, blv_ref, gamma_ref,
                    out_ref, acc_ref):
    """Grid = (batch tiles i, head j, K tiles k).  acc_ref: (tb, Fp) f32."""
    j = pl.program_id(1)
    k = pl.program_id(2)

    @pl.when(k == 0)
    def _():
        acc_ref[...] = jnp.zeros_like(acc_ref)

    # x stays f32 in HBM; cast to the compute dtype on the VPU (slack) here.
    x = x_ref[...].astype(w_ref.dtype)
    acc_ref[...] += jnp.dot(x, w_ref[...], preferred_element_type=jnp.float32)

    @pl.when(k == pl.num_programs(2) - 1)
    def _():
        @pl.when(j == 0)
        def _():
            # mu head: just the folded bias.
            out_ref[...] = acc_ref[...] + bmu_ref[...]

        @pl.when(j == 1)
        def _():
            # logvar head: ReLU -> small matmul -> gamma/beta epilogue.
            h = jnp.maximum(acc_ref[...] + bh_ref[...], 0.0)
            z = jnp.dot(h.astype(w2_ref.dtype), w2_ref[...],
                        preferred_element_type=jnp.float32)
            out_ref[...] = gamma_ref[0] * z + blv_ref[...]


def _bn_fold(running_mean, running_var, eps, weight=None, bias=None):
    """Fold an eval-mode BatchNorm into per-feature scale/shift (f32)."""
    rm = running_mean.astype(jnp.float32)
    rv = running_var.astype(jnp.float32)
    inv = 1.0 / jnp.sqrt(rv + eps)
    scale = inv if weight is None else weight.astype(jnp.float32) * inv
    shift = (-rm * scale if bias is None
             else bias.astype(jnp.float32) - rm * scale)
    return scale, shift


def reghead_forward(x_nchw, params, *, tb=512, tk_cap=3584,
                    compute_dtype=jnp.bfloat16, vmem_budget_frac=0.70):
    B, C, H, W = x_nchw.shape
    K = C * H * W
    F = params["w_mu"].shape[0]  # feat_dim

    # ---------------- Fold everything into two matmuls (glue code) ----------
    s2d_c, t2d_c = _bn_fold(params["bn2d_rm"], params["bn2d_rv"], 2e-5)
    s2d = jnp.repeat(s2d_c, H * W)   # (K,)  matches torch .view(B,-1) order
    t2d = jnp.repeat(t2d_c, H * W)   # (K,)

    smu, tmu = _bn_fold(params["bn_mu_rm"], params["bn_mu_rv"], 2e-5,
                        params["bn_mu_w"], params["bn_mu_b"])
    s1, t1 = _bn_fold(params["bn_lv1_rm"], params["bn_lv1_rv"], 1e-3,
                      params["bn_lv1_w"], params["bn_lv1_b"])
    s2, t2 = _bn_fold(params["bn_lv2_rm"], params["bn_lv2_rv"], 1e-3)
    gamma = params["gamma"].astype(jnp.float32).reshape((1,))
    beta = params["beta"].astype(jnp.float32).reshape(())

    wmu_t = params["w_mu"].T.astype(jnp.float32)     # (K, F)
    w1_t = params["w_lv1"].T.astype(jnp.float32)     # (K, F)
    w2_t = params["w_lv2"].T.astype(jnp.float32)     # (F, F)
    b_mu = params["b_mu"].astype(jnp.float32)

    # mu:  x @ (s2d*Wmu*smu) + ((t2d@Wmu + b_mu)*smu + tmu)
    w_mu_eff = (s2d[:, None] * wmu_t) * smu[None, :]
    b_mu_eff = (t2d @ wmu_t + b_mu) * smu + tmu
    # h:   relu(x @ (s2d*W1*s1) + (t2d@W1)*s1 + t1)
    w_h_eff = (s2d[:, None] * w1_t) * s1[None, :]
    b_h_eff = (t2d @ w1_t) * s1 + t1
    # lv:  gamma * (h @ (W2*s2)) + (gamma*t2 + beta)   (gamma kept out of W2)
    w_lv_eff = w2_t * s2[None, :]
    b_lv_eff = gamma[0] * t2 + beta

    # ---------------- Pick TPU-friendly tile sizes ---------------------------
    Fp = _round_up(F, 128)                    # lane-dense outputs
    Kp = _round_up(K, 128)                    # only pads when K % 128 != 0

    w_isz = jnp.finfo(compute_dtype).bits // 8
    x_isz = jnp.finfo(x_nchw.dtype).bits // 8 if jnp.issubdtype(
        x_nchw.dtype, jnp.floating) else 4

    row_align = 8 if w_isz == 4 else 16       # bf16 path: 16-row tiles
    tb = max(row_align, min(_round_up(tb, row_align), _round_up(B, row_align)))

    try:
        vmem_phys = int(pltpu.get_tpu_info().vmem_capacity_bytes)
    except Exception:  # pragma: no cover - fallback if query unavailable
        vmem_phys = 64 * 1024 * 1024
    budget = int(vmem_phys * vmem_budget_frac)

    def ws_bytes(tb_, tk_):
        return (2 * tk_ * Fp * w_isz          # W_cat block, double-buffered
                + 2 * tb_ * tk_ * x_isz       # x block (f32), double-buffered
                + tb_ * Fp * 4                # f32 accumulator
                + 2 * tb_ * Fp * 4            # output block, double-buffered
                + Fp * Fp * w_isz * 2         # resident W2
                + 16 * Fp * 4)                # biases / slack

    # Largest 128-multiple divisor of Kp that fits the cap and the VMEM budget.
    base = Kp // 128
    tk = 128
    for m in range(1, base + 1):
        if base % m == 0:
            cand = 128 * m
            if cand <= tk_cap and ws_bytes(tb, cand) <= budget:
                tk = max(tk, cand)
    while ws_bytes(tb, tk) > budget and tb > row_align:
        tb = max(row_align, tb // 2)
    Bp = _round_up(B, tb)

    vmem_limit = int(min(max(vmem_phys - (8 << 20), 16 << 20),
                         max(ws_bytes(tb, tk) + (4 << 20), 32 << 20)))

    # ---------------- Build (padded) operands --------------------------------
    def pad_kf(m):  # (K, F) -> (Kp, Fp)
        return jnp.pad(m, ((0, Kp - K), (0, Fp - F)))

    wcat = jnp.concatenate([pad_kf(w_mu_eff), pad_kf(w_h_eff)],
                           axis=1).astype(compute_dtype)          # (Kp, 2*Fp)
    bmu = jnp.pad(b_mu_eff, (0, Fp - F)).reshape(1, Fp).astype(jnp.float32)
    bh = jnp.pad(b_h_eff, (0, Fp - F)).reshape(1, Fp).astype(jnp.float32)
    blv = jnp.pad(b_lv_eff, (0, Fp - F)).reshape(1, Fp).astype(jnp.float32)
    w2p = jnp.pad(w_lv_eff, ((0, Fp - F), (0, Fp - F))).astype(compute_dtype)

    x_flat = x_nchw.reshape(B, K)             # torch .view(B, -1) order
    if Bp != B or Kp != K:
        x_in = jnp.pad(x_flat, ((0, Bp - B), (0, Kp - K)))
    else:
        x_in = x_flat                          # aligned path: zero extra copies

    # ---------------- Pallas call --------------------------------------------
    grid = (Bp // tb, 2, Kp // tk)   # (batch, head, K-reduction last)

    out = pl.pallas_call(
        _reghead_kernel,
        out_shape=jax.ShapeDtypeStruct((Bp, 2 * Fp), jnp.float32),
        grid_spec=pltpu.PrefetchScalarGridSpec(
            num_scalar_prefetch=0,
            grid=grid,
            in_specs=[
                pl.BlockSpec((tb, tk), lambda i, j, k: (i, k)),     # x tile
                pl.BlockSpec((tk, Fp), lambda i, j, k: (k, j)),     # W_cat tile
                pl.BlockSpec((1, Fp), lambda i, j, k: (0, 0)),      # b_mu
                pl.BlockSpec((1, Fp), lambda i, j, k: (0, 0)),      # b_h
                pl.BlockSpec((Fp, Fp), lambda i, j, k: (0, 0)),     # W2 resident
                pl.BlockSpec((1, Fp), lambda i, j, k: (0, 0)),      # b_lv
                pl.BlockSpec(memory_space=pltpu.MemorySpace.SMEM),  # gamma
            ],
            out_specs=pl.BlockSpec((tb, Fp), lambda i, j, k: (i, j)),
            scratch_shapes=[pltpu.VMEM((tb, Fp), jnp.float32)],
        ),
        compiler_params=pltpu.CompilerParams(
            dimension_semantics=("parallel", "parallel", "arbitrary"),
            vmem_limit_bytes=vmem_limit),
    )(x_in, wcat, bmu, bh, w2p, blv, gamma)

    mu = out[:B, :F]
    lv = out[:B, Fp:Fp + F]
    return mu, lv


def reghead_reference(x_nchw, params):
    """Plain-JAX eval-mode reference for validation."""
    B, C, H, W = x_nchw.shape
    K = C * H * W
    eps2d, eps_mu, eps_lv = 2e-5, 2e-5, 1e-3
    xn = (x_nchw - params["bn2d_rm"][None, :, None, None]) / jnp.sqrt(
        params["bn2d_rv"][None, :, None, None] + eps2d)
    xf = xn.reshape(B, K)
    # mu head
    mu = xf @ params["w_mu"].T + params["b_mu"]
    mu = (mu - params["bn_mu_rm"]) / jnp.sqrt(params["bn_mu_rv"] + eps_mu)
    mu = mu * params["bn_mu_w"] + params["bn_mu_b"]
    # logvar head
    h = xf @ params["w_lv1"].T
    h = (h - params["bn_lv1_rm"]) / jnp.sqrt(params["bn_lv1_rv"] + eps_lv)
    h = h * params["bn_lv1_w"] + params["bn_lv1_b"]
    h = jnp.maximum(h, 0.0)
    lv = h @ params["w_lv2"].T
    lv = (lv - params["bn_lv2_rm"]) / jnp.sqrt(params["bn_lv2_rv"] + eps_lv)
    lv = params["gamma"] * lv + params["beta"]
    return mu, lv


def make_params(key, C, H, W, F):
    K = C * H * W
    ks = jax.random.split(key, 16)
    u = lambda k, shape, lo, hi: jax.random.uniform(k, shape, jnp.float32, lo, hi)
    return {
        "gamma": jnp.full((1,), 1e-4, jnp.float32),
        "beta": jnp.full((1,), -7.0, jnp.float32),
        "bn2d_rm": u(ks[0], (C,), -0.5, 0.5),
        "bn2d_rv": u(ks[1], (C,), 0.5, 1.5),
        "w_mu": u(ks[2], (F, K), -0.02, 0.02),
        "b_mu": u(ks[3], (F,), -0.1, 0.1),
        "bn_mu_rm": u(ks[4], (F,), -0.5, 0.5),
        "bn_mu_rv": u(ks[5], (F,), 0.5, 1.5),
        "bn_mu_w": u(ks[6], (F,), 0.5, 1.5),
        "bn_mu_b": u(ks[7], (F,), -0.1, 0.1),
        "w_lv1": u(ks[8], (F, K), -0.02, 0.02),
        "bn_lv1_rm": u(ks[9], (F,), -0.5, 0.5),
        "bn_lv1_rv": u(ks[10], (F,), 0.5, 1.5),
        "bn_lv1_w": u(ks[11], (F,), 0.5, 1.5),
        "bn_lv1_b": u(ks[12], (F,), -0.1, 0.1),
        "w_lv2": u(ks[13], (F, F), -0.1, 0.1),
        "bn_lv2_rm": u(ks[14], (F,), -0.5, 0.5),
        "bn_lv2_rv": u(ks[15], (F,), 0.5, 1.5),
    }


if __name__ == "__main__":
    # Small shapes consistent with the module structure (real: C=512, 7x7, F=512).
    B, C, H, W, F = 16, 32, 7, 7, 64
    key = jax.random.PRNGKey(0)
    kx, kp = jax.random.split(key)
    x = jax.random.normal(kx, (B, C, H, W), jnp.float32)
    params = make_params(kp, C, H, W, F)

    mu_ref, lv_ref = reghead_reference(x, params)

    # f32 path with a small tk cap so the K-accumulation loop is exercised
    # (Kp = 1664 -> tk = 128 -> 13 reduction steps).
    mu32, lv32 = jax.block_until_ready(
        reghead_forward(x, params, tb=512, tk_cap=512,
                        compute_dtype=jnp.float32))
    assert mu32.shape == (B, F) and lv32.shape == (B, F)
    assert jnp.allclose(mu32, mu_ref, atol=2e-4, rtol=2e-4)
    assert jnp.allclose(lv32, lv_ref, atol=2e-5, rtol=1e-4)

    # bf16 production path (single K step here; halves weight HBM traffic,
    # f32 accumulation, gamma applied in f32 in the epilogue).
    mu16, lv16 = jax.block_until_ready(
        reghead_forward(x, params, compute_dtype=jnp.bfloat16))
    assert mu16.shape == (B, F) and lv16.shape == (B, F)
    assert jnp.allclose(mu16, mu_ref, atol=3e-2, rtol=3e-2)
    assert jnp.allclose(lv16, lv_ref, atol=1e-3, rtol=1e-3)

    print("KERNEL_OK")
</pallas_src>

<mosaic_0001>
module attributes {stable_mosaic.version = 11 : i64} {
  func.func @_reghead_kernel(%arg0: i32, %arg1: i32, %arg2: i32, %arg3: memref<16x128xf32, #tpu.memory_space<vmem>>, %arg4: memref<128x128xf32, #tpu.memory_space<vmem>>, %arg5: memref<1x128xf32, #tpu.memory_space<vmem>>, %arg6: memref<1x128xf32, #tpu.memory_space<vmem>>, %arg7: memref<128x128xf32, #tpu.memory_space<vmem>>, %arg8: memref<1x128xf32, #tpu.memory_space<vmem>>, %arg9: memref<1xf32, #tpu.memory_space<smem>>, %arg10: memref<16x128xf32, #tpu.memory_space<vmem>>, %arg11: memref<16x128xf32, #tpu.memory_space<vmem>>) attributes {dimension_semantics = [#tpu.dimension_semantics<parallel>, #tpu.dimension_semantics<parallel>, #tpu.dimension_semantics<arbitrary>], iteration_bounds = array<i64: 1, 2, 13>, scalar_prefetch = 0 : i64, scratch_operands = 1 : i64, tpu.core_type = #tpu.core_type<tc>, window_params = [{transform_indices = @transform_0, window_bounds = array<i64: 16, 128>}, {transform_indices = @transform_1, window_bounds = array<i64: 128, 128>}, {pipeline_mode = #tpu.pipeline_mode<synchronous>, transform_indices = @transform_2, window_bounds = array<i64: 1, 128>}, {pipeline_mode = #tpu.pipeline_mode<synchronous>, transform_indices = @transform_3, window_bounds = array<i64: 1, 128>}, {pipeline_mode = #tpu.pipeline_mode<synchronous>, transform_indices = @transform_4, window_bounds = array<i64: 128, 128>}, {pipeline_mode = #tpu.pipeline_mode<synchronous>, transform_indices = @transform_5, window_bounds = array<i64: 1, 128>}, {transform_indices = @transform_6, window_bounds = array<i64: 1>}, {transform_indices = @transform_7, window_bounds = array<i64: 16, 128>}]} {
    %c0_i32 = arith.constant 0 : i32
    %0 = arith.cmpi eq, %arg2, %c0_i32 : i32
    %1 = arith.extui %0 : i1 to i32
    %c0_i32_0 = arith.constant 0 : i32
    %2 = arith.cmpi ne, %1, %c0_i32_0 : i32
    scf.if %2 {
      %cst_9 = arith.constant 0.000000e+00 : f32
      %12 = vector.broadcast %cst_9 : f32 to vector<16x128xf32>
      %c0_10 = arith.constant 0 : index
      %c0_11 = arith.constant 0 : index
      %13 = vector.load %arg11[%c0_10, %c0_11] : memref<16x128xf32, #tpu.memory_space<vmem>>, vector<16x128xf32>
      tpu.vector_store %arg11[%c0_10, %c0_11], %12 {strides = array<i32>} : memref<16x128xf32, #tpu.memory_space<vmem>>, vector<16x128xf32>,
    } else {
    }
    %c0 = arith.constant 0 : index
    %c0_1 = arith.constant 0 : index
    %3 = vector.load %arg3[%c0, %c0_1] : memref<16x128xf32, #tpu.memory_space<vmem>>, vector<16x128xf32>
    %c0_2 = arith.constant 0 : index
    %c0_3 = arith.constant 0 : index
    %4 = vector.load %arg11[%c0_2, %c0_3] : memref<16x128xf32, #tpu.memory_space<vmem>>, vector<16x128xf32>
    %c0_4 = arith.constant 0 : index
    %c0_5 = arith.constant 0 : index
    %5 = vector.load %arg4[%c0_4, %c0_5] : memref<128x128xf32, #tpu.memory_space<vmem>>, vector<128x128xf32>
    %cst = arith.constant dense<0.000000e+00> : vector<16x128xf32>
    %6 = tpu.matmul %3, %5, %cst {dimension_numbers = #tpu.dot_dimension_numbers<[1], [0], [0], [1], [0, 0, 1, 1], [], []>} : vector<16x128xf32>, vector<128x128xf32>, vector<16x128xf32> -> vector<16x128xf32>
    %7 = arith.addf %4, %6 : vector<16x128xf32>
    %c0_6 = arith.constant 0 : index
    %c0_7 = arith.constant 0 : index
    %8 = vector.load %arg11[%c0_6, %c0_7] : memref<16x128xf32, #tpu.memory_space<vmem>>, vector<16x128xf32>
    tpu.vector_store %arg11[%c0_6, %c0_7], %7 {strides = array<i32>} : memref<16x128xf32, #tpu.memory_space<vmem>>, vector<16x128xf32>,
    %c12_i32 = arith.constant 12 : i32
    %9 = arith.cmpi eq, %arg2, %c12_i32 : i32
    %10 = arith.extui %9 : i1 to i32
    %c0_i32_8 = arith.constant 0 : i32
    %11 = arith.cmpi ne, %10, %c0_i32_8 : i32
    scf.if %11 {
      %c0_i32_9 = arith.constant 0 : i32
      %12 = arith.cmpi eq, %arg1, %c0_i32_9 : i32
      %13 = arith.extui %12 : i1 to i32
      %c0_i32_10 = arith.constant 0 : i32
      %14 = arith.cmpi ne, %13, %c0_i32_10 : i32
      scf.if %14 {
        %c0_12 = arith.constant 0 : index
        %c0_13 = arith.constant 0 : index
        %18 = vector.load %arg11[%c0_12, %c0_13] : memref<16x128xf32, #tpu.memory_space<vmem>>, vector<16x128xf32>
        %c0_14 = arith.constant 0 : index
        %c0_15 = arith.constant 0 : index
        %19 = vector.load %arg5[%c0_14, %c0_15] : memref<1x128xf32, #tpu.memory_space<vmem>>, vector<1x128xf32>
        %20 = vector.broadcast %19 : vector<1x128xf32> to vector<16x128xf32>
        %21 = arith.addf %18, %20 : vector<16x128xf32>
        %c0_16 = arith.constant 0 : index
        %c0_17 = arith.constant 0 : index
        %22 = vector.load %arg10[%c0_16, %c0_17] : memref<16x128xf32, #tpu.memory_space<vmem>>, vector<16x128xf32>
        tpu.vector_store %arg10[%c0_16, %c0_17], %21 {strides = array<i32>} : memref<16x128xf32, #tpu.memory_space<vmem>>, vector<16x128xf32>,
      } else {
      }
      %c1_i32 = arith.constant 1 : i32
      %15 = arith.cmpi eq, %arg1, %c1_i32 : i32
      %16 = arith.extui %15 : i1 to i32
      %c0_i32_11 = arith.constant 0 : i32
      %17 = arith.cmpi ne, %16, %c0_i32_11 : i32
      scf.if %17 {
        %c0_12 = arith.constant 0 : index
        %c0_13 = arith.constant 0 : index
        %18 = vector.load %arg11[%c0_12, %c0_13] : memref<16x128xf32, #tpu.memory_space<vmem>>, vector<16x128xf32>
        %c0_14 = arith.constant 0 : index
        %c0_15 = arith.constant 0 : index
        %19 = vector.load %arg6[%c0_14, %c0_15] : memref<1x128xf32, #tpu.memory_space<vmem>>, vector<1x128xf32>
        %20 = vector.broadcast %19 : vector<1x128xf32> to vector<16x128xf32>
        %21 = arith.addf %18, %20 : vector<16x128xf32>
        %cst_16 = arith.constant 0.000000e+00 : f32
        %22 = vector.broadcast %cst_16 : f32 to vector<16x128xf32>
        %23 = arith.maximumf %21, %22 : vector<16x128xf32>
        %c0_17 = arith.constant 0 : index
        %c0_18 = arith.constant 0 : index
        %24 = vector.load %arg7[%c0_17, %c0_18] : memref<128x128xf32, #tpu.memory_space<vmem>>, vector<128x128xf32>
        %cst_19 = arith.constant dense<0.000000e+00> : vector<16x128xf32>
        %25 = tpu.matmul %23, %24, %cst_19 {dimension_numbers = #tpu.dot_dimension_numbers<[1], [0], [0], [1], [0, 0, 1, 1], [], []>} : vector<16x128xf32>, vector<128x128xf32>, vector<16x128xf32> -> vector<16x128xf32>
        %c0_20 = arith.constant 0 : index
        %26 = memref.load %arg9[%c0_20] : memref<1xf32, #tpu.memory_space<smem>>
        %27 = vector.broadcast %26 : f32 to vector<16x128xf32>
        %28 = arith.mulf %27, %25 : vector<16x128xf32>
        %c0_21 = arith.constant 0 : index
        %c0_22 = arith.constant 0 : index
        %29 = vector.load %arg8[%c0_21, %c0_22] : memref<1x128xf32, #tpu.memory_space<vmem>>, vector<1x128xf32>
        %30 = vector.broadcast %29 : vector<1x128xf32> to vector<16x128xf32>
        %31 = arith.addf %28, %30 : vector<16x128xf32>
        %c0_23 = arith.constant 0 : index
        %c0_24 = arith.constant 0 : index
        %32 = vector.load %arg10[%c0_23, %c0_24] : memref<16x128xf32, #tpu.memory_space<vmem>>, vector<16x128xf32>
        tpu.vector_store %arg10[%c0_23, %c0_24], %31 {strides = array<i32>} : memref<16x128xf32, #tpu.memory_space<vmem>>, vector<16x128xf32>,
      } else {
      }
    } else {
    }
    return
  }
  func.func @transform_0(%arg0: i32, %arg1: i32, %arg2: i32) -> (i32, i32) {
    %c0_i32 = arith.constant 0 : i32
    return %arg0, %arg2 : i32, i32
  }
  func.func @transform_1(%arg0: i32, %arg1: i32, %arg2: i32) -> (i32, i32) {
    %c0_i32 = arith.constant 0 : i32
    return %arg2, %arg1 : i32, i32
  }
  func.func @transform_2(%arg0: i32, %arg1: i32, %arg2: i32) -> (i32, i32) {
    %c0_i32 = arith.constant 0 : i32
    %c0_i32_0 = arith.constant 0 : i32
    %c0_i32_1 = arith.constant 0 : i32
    return %c0_i32, %c0_i32_0 : i32, i32
  }
  func.func @transform_3(%arg0: i32, %arg1: i32, %arg2: i32) -> (i32, i32) {
    %c0_i32 = arith.constant 0 : i32
    %c0_i32_0 = arith.constant 0 : i32
    %c0_i32_1 = arith.constant 0 : i32
    return %c0_i32, %c0_i32_0 : i32, i32
  }
  func.func @transform_4(%arg0: i32, %arg1: i32, %arg2: i32) -> (i32, i32) {
    %c0_i32 = arith.constant 0 : i32
    %c0_i32_0 = arith.constant 0 : i32
    %c0_i32_1 = arith.constant 0 : i32
    return %c0_i32, %c0_i32_0 : i32, i32
  }
  func.func @transform_5(%arg0: i32, %arg1: i32, %arg2: i32) -> (i32, i32) {
    %c0_i32 = arith.constant 0 : i32
    %c0_i32_0 = arith.constant 0 : i32
    %c0_i32_1 = arith.constant 0 : i32
    return %c0_i32, %c0_i32_0 : i32, i32
  }
  func.func @transform_6(%arg0: i32, %arg1: i32, %arg2: i32) -> i32 {
    %c0_i32 = arith.constant 0 : i32
    %c0_i32_0 = arith.constant 0 : i32
    return %c0_i32 : i32
  }
  func.func @transform_7(%arg0: i32, %arg1: i32, %arg2: i32) -> (i32, i32) {
    %c0_i32 = arith.constant 0 : i32
    return %arg0, %arg1 : i32, i32
  }
}

</mosaic_0001>

<llo_original>
// kernel: tpu_custom_call.1
$region0: #{tpu_custom_call.1}
  #allocation0 [shape = 'u32[]', space=smem, size = 0x4, offset = 0x4, fixed_abs, tag = 'smem constant byte address 0x4 - core index']
  #allocation1 [shape = 'u32[144,128]{1,0:T(1,128)}', space=vmem, size = 0x12000, scoped, tag = 'internal scratch']
  #allocation2 [shape = 'f32[16,128]{1,0:T(8,128)}', space=vmem, size = 0x2000, scoped, tag = 'scratch operand']
  #allocation3 [shape = 'f32[1]{0:T(128)S(6)}', space=smem, size = 0x200, scoped, tag = 'scoped memory for tpu_custom_call.1']
  %s0 = inlined_call_operand.hbm [shape: f32[16,1664], index: 0, kind: input, shape index: {}]
  %s1 = inlined_call_operand.hbm [shape: f32[1664,256], index: 1, kind: input, shape index: {}]
  %s2 = inlined_call_operand.hbm [shape: f32[1,128], index: 2, kind: input, shape index: {}]
  %s3 = inlined_call_operand.hbm [shape: f32[1,128], index: 3, kind: input, shape index: {}]
  %s4 = inlined_call_operand.hbm [shape: f32[128,128], index: 4, kind: input, shape index: {}]
  %s5 = inlined_call_operand.hbm [shape: f32[1,128], index: 5, kind: input, shape index: {}]
  %s6 = inlined_call_operand.<no memory space> [shape: f32[1], index: 6, kind: input, shape index: {}]
  %s7 = inlined_call_operand.hbm [shape: f32[16,256], index: 7, kind: output, shape index: {}]
  %s8 = sld [smem:[#allocation0]]
  $region101: #{tpu_custom_call.1} parent=0
    _
  %s10 = ssub.s32 1, %s8
  %s11 = scalar_select 0, %s10, %s8
  %12 = sst [smem:[#allocation3]] %s6
  $region1: #{tpu_custom_call.1} parent=0
    #allocation4 [shape = 'u8[16384]{0}', space=vmem, size = 0x4000, scoped, tag = 'input window, operand 0']
    #allocation5 [shape = 's32[2]{0}', space=sflag, size = 0x8, scoped, tag = 'scoped memory for tpu_custom_call.1']
    #allocation6 [shape = 's32[2]{0}', space=sflag, size = 0x8, scoped, tag = 'scoped memory for tpu_custom_call.1']
    #allocation7 [shape = 'u8[131072]{0}', space=vmem, size = 0x20000, scoped, tag = 'input window, operand 1']
    #allocation8 [shape = 's32[2]{0}', space=sflag, size = 0x8, scoped, tag = 'scoped memory for tpu_custom_call.1']
    #allocation9 [shape = 'u8[512]{0}', space=vmem, size = 0x400, scoped, tag = 'input window, operand 2, single buffered']
    #allocation10 [shape = 'u8[512]{0}', space=vmem, size = 0x400, scoped, tag = 'input window, operand 3, single buffered']
    #allocation11 [shape = 's32[1]{0}', space=sflag, size = 0x4, scoped, tag = 'scoped memory for tpu_custom_call.1']
    #allocation12 [shape = 'u8[65536]{0}', space=vmem, size = 0x10000, scoped, tag = 'input window, operand 4, single buffered']
    #allocation13 [shape = 'u8[512]{0}', space=vmem, size = 0x400, scoped, tag = 'input window, operand 5, single buffered']
    #allocation14 [shape = 's32[1]{0}', space=sflag, size = 0x4, scoped, tag = 'scoped memory for tpu_custom_call.1']
    #allocation15 [shape = 'u8[16384]{0}', space=vmem, size = 0x4000, scoped, tag = 'output window, operand 0']
    %13 = vsyncpa [#allocation5], 0
    %s14 = scalar_lea.sflag [#allocation5], 1
    %15 = vsyncpa %s14, 0
    %16 = vsyncpa [#allocation8], 0
    %s17 = scalar_lea.sflag [#allocation8], 1
    %18 = vsyncpa %s17, 0
    %19 = vsyncpa [#allocation11], 0
    %20 = vsyncpa [#allocation14], 0
    %21 = vsyncpa [#allocation6], 0
    %s22 = scalar_lea.sflag [#allocation6], 1
    %23 = vsyncpa %s22, 0
    loop: start=0, step=1, limit=28
    $region2: #{tpu_custom_call.1} parent=1 // loop_pre_header
      _
    $region3: #{tpu_custom_call.1} parent=1 // loop_header
      %s25 = sphi 0, %s29
      %p26 = scmp.ge.s32.totalorder %s25, 28
      %s32 = sphi 0, %s51
      %s33 = sphi 0, %s47
      %s34 = sphi 0, %s43
      %s35 = sphi 0, %s32
      %s36 = sphi 0, %s33
      %s37 = sphi 0, %s34
      %s38 = sphi 0, %s35
      %s39 = sphi 0, %s36
      %s40 = sphi 0, %s37
      %s56 = sphi 0, %s58
      %s59 = sphi 0, %s56
      %s60 = sphi 0, %s59
      %s76 = sphi 0, %s60
      %s84 = sphi 0, %s86
      %s87 = sphi 0, %s84
      %s88 = sphi 0, %s87
      %s104 = sphi 0, %s88
      %s108 = sphi 0, %s108
      %s110 = sphi 0, %s108
      %s111 = sphi 0, %s110
      %s125 = sphi 0, %s111
      %s129 = sphi 0, %s129
      %s131 = sphi 0, %s129
      %s132 = sphi 0, %s131
      %s146 = sphi 0, %s132
      %s150 = sphi 0, %s150
      %s152 = sphi 0, %s150
      %s153 = sphi 0, %s152
      %s167 = sphi 0, %s153
      %s171 = sphi 0, %s171
      %s173 = sphi 0, %s171
      %s174 = sphi 0, %s173
      %s188 = sphi 0, %s174
      %s192 = sphi 0, %s192
      %s194 = sphi 0, %s192
      %s195 = sphi 0, %s194
      %s209 = sphi 0, %s195
      %s217 = sphi 0, %s219
      %s220 = sphi 0, %s217
      %s221 = sphi 0, %s220
      %s237 = sphi 0, %s221
    $region4: #{tpu_custom_call.1} parent=1 // loop_header_branch
      %28 = sbr.rel (%p26) target = $region8
    $region5: #{tpu_custom_call.1} parent=1 // loop_body
      %s30 = ssub.s32 %s25, 1
      %s31 = ssub.s32 %s25, 2
      %s41 = sadd.s32 1, %s34
      %p42 = scmp.ge.s32.totalorder %s41, 13
      %s43 = scalar_select %p42, 0, %s41
      %s44 = sadd.s32 1, %s33
      %s45 = scalar_select %p42, %s44, %s33
      %p46 = scmp.ge.s32.totalorder %s45, 2
      %s47 = scalar_select %p46, 0, %s45
      %s48 = sadd.s32 1, %s32
      %s49 = scalar_select %p46, %s48, %s32
      %p50 = scmp.ge.s32.totalorder %s49, 1
      %s51 = scalar_select %p50, 0, %s49
      %s52 = ssub.s32 %s32, %s51
      %s53 = ssub.s32 %s34, %s43
      %s54 = sor.u32 %s52, %s53
      %p55 = scmp.eq.s32.totalorder %s54, 0
      %s57 = sadd.s32 %s56, 1
      %s58 = scalar_select %p55, %s56, %s57
      %p61 = pneg %p55
      %p62 = scmp.eq.s32.totalorder %s25, 25
      %p63 = por %p61, %p62
      %p64 = scmp.ne.s32.totalorder %s56, %s59
      %p65 = scmp.eq.s32.totalorder %s25, 0
      %p66 = por %p64, %p65
      %p67 = scmp.ne.s32.totalorder %s56, %s59
      %p68 = scmp.eq.s32.totalorder %s30, 25
      %p69 = por %p67, %p68
      %p70 = scmp.ne.s32.totalorder %s59, %s60
      %p71 = scmp.eq.s32.totalorder %s30, 0
      %p72 = por %p70, %p71
      %p73 = scmp.ne.s32.totalorder %s59, %s60
      %p74 = scmp.eq.s32.totalorder %s31, 25
      %p75 = por %p73, %p74
      %p77 = scmp.ne.s32.totalorder %s60, %s76
      %p78 = scmp.eq.s32.totalorder %s31, 0
      %p79 = por %p77, %p78
      %s80 = ssub.s32 %s34, %s43
      %s81 = ssub.s32 %s33, %s47
      %s82 = sor.u32 %s80, %s81
      %p83 = scmp.eq.s32.totalorder %s82, 0
      %s85 = sadd.s32 %s84, 1
      %s86 = scalar_select %p83, %s84, %s85
      %p89 = pneg %p83
      %p90 = scmp.eq.s32.totalorder %s25, 25
      %p91 = por %p89, %p90
      %p92 = scmp.ne.s32.totalorder %s84, %s87
      %p93 = scmp.eq.s32.totalorder %s25, 0
      %p94 = por %p92, %p93
      %p95 = scmp.ne.s32.totalorder %s84, %s87
      %p96 = scmp.eq.s32.totalorder %s30, 25
      %p97 = por %p95, %p96
      %p98 = scmp.ne.s32.totalorder %s87, %s88
      %p99 = scmp.eq.s32.totalorder %s30, 0
      %p100 = por %p98, %p99
      %p101 = scmp.ne.s32.totalorder %s87, %s88
      %p102 = scmp.eq.s32.totalorder %s31, 25
      %p103 = por %p101, %p102
      %p105 = scmp.ne.s32.totalorder %s88, %s104
      %p106 = scmp.eq.s32.totalorder %s31, 0
      %p107 = por %p105, %p106
      %s109 = sadd.s32 %s108, 1
      %p112 = scmp.eq.s32.totalorder %s25, 25
      %p113 = scmp.ne.s32.totalorder %s108, %s110
      %p114 = scmp.eq.s32.totalorder %s25, 0
      %p115 = por %p113, %p114
      %p116 = scmp.ne.s32.totalorder %s108, %s110
      %p117 = scmp.eq.s32.totalorder %s30, 25
      %p118 = por %p116, %p117
      %p119 = scmp.ne.s32.totalorder %s110, %s111
      %p120 = scmp.eq.s32.totalorder %s30, 0
      %p121 = por %p119, %p120
      %p122 = scmp.ne.s32.totalorder %s110, %s111
      %p123 = scmp.eq.s32.totalorder %s31, 25
      %p124 = por %p122, %p123
      %p126 = scmp.ne.s32.totalorder %s111, %s125
      %p127 = scmp.eq.s32.totalorder %s31, 0
      %p128 = por %p126, %p127
      %s130 = sadd.s32 %s129, 1
      %p133 = scmp.eq.s32.totalorder %s25, 25
      %p134 = scmp.ne.s32.totalorder %s129, %s131
      %p135 = scmp.eq.s32.totalorder %s25, 0
      %p136 = por %p134, %p135
      %p137 = scmp.ne.s32.totalorder %s129, %s131
      %p138 = scmp.eq.s32.totalorder %s30, 25
      %p139 = por %p137, %p138
      %p140 = scmp.ne.s32.totalorder %s131, %s132
      %p141 = scmp.eq.s32.totalorder %s30, 0
      %p142 = por %p140, %p141
      %p143 = scmp.ne.s32.totalorder %s131, %s132
      %p144 = scmp.eq.s32.totalorder %s31, 25
      %p145 = por %p143, %p144
      %p147 = scmp.ne.s32.totalorder %s132, %s146
      %p148 = scmp.eq.s32.totalorder %s31, 0
      %p149 = por %p147, %p148
      %s151 = sadd.s32 %s150, 1
      %p154 = scmp.eq.s32.totalorder %s25, 25
      %p155 = scmp.ne.s32.totalorder %s150, %s152
      %p156 = scmp.eq.s32.totalorder %s25, 0
      %p157 = por %p155, %p156
      %p158 = scmp.ne.s32.totalorder %s150, %s152
      %p159 = scmp.eq.s32.totalorder %s30, 25
      %p160 = por %p158, %p159
      %p161 = scmp.ne.s32.totalorder %s152, %s153
      %p162 = scmp.eq.s32.totalorder %s30, 0
      %p163 = por %p161, %p162
      %p164 = scmp.ne.s32.totalorder %s152, %s153
      %p165 = scmp.eq.s32.totalorder %s31, 25
      %p166 = por %p164, %p165
      %p168 = scmp.ne.s32.totalorder %s153, %s167
      %p169 = scmp.eq.s32.totalorder %s31, 0
      %p170 = por %p168, %p169
      %s172 = sadd.s32 %s171, 1
      %p175 = scmp.eq.s32.totalorder %s25, 25
      %p176 = scmp.ne.s32.totalorder %s171, %s173
      %p177 = scmp.eq.s32.totalorder %s25, 0
      %p178 = por %p176, %p177
      %p179 = scmp.ne.s32.totalorder %s171, %s173
      %p180 = scmp.eq.s32.totalorder %s30, 25
      %p181 = por %p179, %p180
      %p182 = scmp.ne.s32.totalorder %s173, %s174
      %p183 = scmp.eq.s32.totalorder %s30, 0
      %p184 = por %p182, %p183
      %p185 = scmp.ne.s32.totalorder %s173, %s174
      %p186 = scmp.eq.s32.totalorder %s31, 25
      %p187 = por %p185, %p186
      %p189 = scmp.ne.s32.totalorder %s174, %s188
      %p190 = scmp.eq.s32.totalorder %s31, 0
      %p191 = por %p189, %p190
      %s193 = sadd.s32 %s192, 1
      %p196 = scmp.eq.s32.totalorder %s25, 25
      %p197 = scmp.ne.s32.totalorder %s192, %s194
      %p198 = scmp.eq.s32.totalorder %s25, 0
      %p199 = por %p197, %p198
      %p200 = scmp.ne.s32.totalorder %s192, %s194
      %p201 = scmp.eq.s32.totalorder %s30, 25
      %p202 = por %p200, %p201
      %p203 = scmp.ne.s32.totalorder %s194, %s195
      %p204 = scmp.eq.s32.totalorder %s30, 0
      %p205 = por %p203, %p204
      %p206 = scmp.ne.s32.totalorder %s194, %s195
      %p207 = scmp.eq.s32.totalorder %s31, 25
      %p208 = por %p206, %p207
      %p210 = scmp.ne.s32.totalorder %s195, %s209
      %p211 = scmp.eq.s32.totalorder %s31, 0
      %p212 = por %p210, %p211
      %s213 = ssub.s32 %s32, %s51
      %s214 = ssub.s32 %s33, %s47
      %s215 = sor.u32 %s213, %s214
      %p216 = scmp.eq.s32.totalorder %s215, 0
      %s218 = sadd.s32 %s217, 1
      %s219 = scalar_select %p216, %s217, %s218
      %p222 = pneg %p216
      %p223 = scmp.eq.s32.totalorder %s25, 25
      %p224 = por %p222, %p223
      %p225 = scmp.ne.s32.totalorder %s217, %s220
      %p226 = scmp.eq.s32.totalorder %s25, 0
      %p227 = por %p225, %p226
      %p228 = scmp.ne.s32.totalorder %s217, %s220
      %p229 = scmp.eq.s32.totalorder %s30, 25
      %p230 = por %p228, %p229
      %p231 = scmp.ne.s32.totalorder %s220, %s221
      %p232 = scmp.eq.s32.totalorder %s30, 0
      %p233 = por %p231, %p232
      %p234 = scmp.ne.s32.totalorder %s220, %s221
      %p235 = scmp.eq.s32.totalorder %s31, 25
      %p236 = por %p234, %p235
      %p238 = scmp.ne.s32.totalorder %s221, %s237
      %p239 = scmp.eq.s32.totalorder %s31, 0
      %p240 = por %p238, %p239
      %p241 = scmp.le.s32.totalorder 1, %s25
      %p242 = scmp.lt.s32.totalorder %s25, 27
      %p243 = pnand %p241, %p242
      %p244 = pneg %p243
      // Predicated region
      $region9: #{tpu_custom_call.1} parent=5 // pred_check
        _
      $region10: #{tpu_custom_call.1} parent=5 // pred_check_branch
        %246 = sbr.rel (%p243) target = $region12
      $region11: #{tpu_custom_call.1} parent=5 // pred_region
        %s247 = ssub.s32 %s25, 1
        // Predicated region
        $region13: #{tpu_custom_call.1} parent=11 // pred_check
          %p248 = pneg %p121
        $region14: #{tpu_custom_call.1} parent=11 // pred_check_branch
          %250 = sbr.rel (%p248) target = $region16
        $region15: #{tpu_custom_call.1} parent=11 // pred_region
          %s252 = ssub.s32 16, 16
          %253 = vsyncadd [#allocation8], %s252
          %s255 = sshll.u32 [#allocation9], 4
          %s256 = int_to_ptr.vmem [resolvable:$true] %s255
          %258 = dma.hbm_to_vmem [thread:$0]  %s2, 16, %s256, [#allocation8]
        $region16: #{tpu_custom_call.1} parent=11 // pred_fallthru
          _
        // Predicated region
        $region17: #{tpu_custom_call.1} parent=11 // pred_check
          %p259 = pneg %p142
        $region18: #{tpu_custom_call.1} parent=11 // pred_check_branch
          %261 = sbr.rel (%p259) target = $region20
        $region19: #{tpu_custom_call.1} parent=11 // pred_region
          %s263 = ssub.s32 16, 16
          %264 = vsyncadd [#allocation11], %s263
          %s266 = sshll.u32 [#allocation10], 4
          %s267 = int_to_ptr.vmem [resolvable:$true] %s266
          %269 = dma.hbm_to_vmem [thread:$0]  %s3, 16, %s267, [#allocation11]
        $region20: #{tpu_custom_call.1} parent=11 // pred_fallthru
          _
        // Predicated region
        $region21: #{tpu_custom_call.1} parent=11 // pred_check
          %p270 = pneg %p163
        $region22: #{tpu_custom_call.1} parent=11 // pred_check_branch
          %272 = sbr.rel (%p270) target = $region24
        $region23: #{tpu_custom_call.1} parent=11 // pred_region
          %s274 = ssub.s32 2048, 2048
          %275 = vsyncadd [#allocation11], %s274
          %s276 = sshll.u32 [#allocation12], 4
          %s277 = int_to_ptr.vmem [resolvable:$true] %s276
          %282 = dma.hbm_to_vmem [thread:$0]  %s4, 2048, %s277, [#allocation11], 128, 128, 8
        $region24: #{tpu_custom_call.1} parent=11 // pred_fallthru
          _
        // Predicated region
        $region25: #{tpu_custom_call.1} parent=11 // pred_check
          %p283 = pneg %p184
        $region26: #{tpu_custom_call.1} parent=11 // pred_check_branch
          %285 = sbr.rel (%p283) target = $region28
        $region27: #{tpu_custom_call.1} parent=11 // pred_region
          %s287 = ssub.s32 16, 16
          %288 = vsyncadd [#allocation14], %s287
          %s290 = sshll.u32 [#allocation13], 4
          %s291 = int_to_ptr.vmem [resolvable:$true] %s290
          %293 = dma.hbm_to_vmem [thread:$0]  %s5, 16, %s291, [#allocation14]
        $region28: #{tpu_custom_call.1} parent=11 // pred_fallthru
          _
        // Predicated region
        $region29: #{tpu_custom_call.1} parent=11 // pred_check
          %p294 = pneg %p205
        $region30: #{tpu_custom_call.1} parent=11 // pred_check_branch
          %296 = sbr.rel (%p294) target = $region32
        $region31: #{tpu_custom_call.1} parent=11 // pred_region
          _
        $region32: #{tpu_custom_call.1} parent=11 // pred_fallthru
          _
      $region12: #{tpu_custom_call.1} parent=5 // pred_fallthru
        _
      %p297 = scmp.lt.s32.totalorder %s25, 26
      // Predicated region
      $region33: #{tpu_custom_call.1} parent=5 // pred_check
        %p298 = pneg %p297
      $region34: #{tpu_custom_call.1} parent=5 // pred_check_branch
        %300 = sbr.rel (%p298) target = $region36
      $region35: #{tpu_custom_call.1} parent=5 // pred_region
        // Predicated region
        $region37: #{tpu_custom_call.1} parent=35 // pred_check
          %p301 = pneg %p66
        $region38: #{tpu_custom_call.1} parent=35 // pred_check_branch
          %303 = sbr.rel (%p301) target = $region40
        $region39: #{tpu_custom_call.1} parent=35 // pred_region
          %s304 = sand.u32 %s56, 1
          %s305 = scalar_lea.sflag [#allocation5], %s304
          %s306 = sand.u32 %s56, 1
          %s307 = smul.addr %s306, 16
          %s308 = scalar_lea.vmem [#allocation4], %s307
          %s309 = smul.u32 2, %s32
          %s311 = ssub.s32 256, 256
          %312 = vsyncadd %s305, %s311
          %s313 = smul.addr %s309, 13
          %s314 = sadd.s32 %s34, %s313
          %s315 = smul.addr %s314, 128
          %s316 = scalar_lea.hbm %s0, %s315
          %s317 = sshll.u32 %s308, 4
          %s318 = int_to_ptr.vmem [resolvable:$true] %s317
          %323 = dma.hbm_to_vmem [thread:$0]  %s316, 256, %s318, %s305, 1664, 128, 8
        $region40: #{tpu_custom_call.1} parent=35 // pred_fallthru
          _
        // Predicated region
        $region41: #{tpu_custom_call.1} parent=35 // pred_check
          %p324 = pneg %p94
        $region42: #{tpu_custom_call.1} parent=35 // pred_check_branch
          %326 = sbr.rel (%p324) target = $region44
        $region43: #{tpu_custom_call.1} parent=35 // pred_region
          %s327 = sand.u32 %s25, 1
          %s328 = scalar_lea.sflag [#allocation8], %s327
          %s329 = sand.u32 %s84, 1
          %s330 = smul.addr %s329, 128
          %s331 = scalar_lea.vmem [#allocation7], %s330
          %s332 = smul.u32 16, %s34
          %s334 = ssub.s32 2048, 2048
          %335 = vsyncadd %s328, %s334
          %s336 = smul.addr %s332, 2
          %s337 = sadd.s32 %s33, %s336
          %s338 = smul.addr %s337, 128
          %s339 = scalar_lea.hbm %s1, %s338
          %s340 = sshll.u32 %s331, 4
          %s341 = int_to_ptr.vmem [resolvable:$true] %s340
          %346 = dma.hbm_to_vmem [thread:$0]  %s339, 2048, %s341, %s328, 256, 128, 8
        $region44: #{tpu_custom_call.1} parent=35 // pred_fallthru
          _
      $region36: #{tpu_custom_call.1} parent=5 // pred_fallthru
        _
      %p347 = scmp.le.s32.totalorder 1, %s25
      %p348 = scmp.lt.s32.totalorder %s25, 27
      %p349 = pnand %p347, %p348
      %p350 = pneg %p349
      // Predicated region
      $region45: #{tpu_custom_call.1} parent=5 // pred_check
        _
      $region46: #{tpu_custom_call.1} parent=5 // pred_check_branch
        %352 = sbr.rel (%p349) target = $region48
      $region47: #{tpu_custom_call.1} parent=5 // pred_region
        %s353 = ssub.s32 %s25, 1
        %s354 = sand.u32 %s59, 1
        %s355 = scalar_lea.sflag [#allocation5], %s354
        %s356 = sand.u32 %s59, 1
        %s357 = smul.addr %s356, 16
        %s358 = scalar_lea.vmem [#allocation4], %s357
        // Predicated region
        $region49: #{tpu_custom_call.1} parent=47 // pred_check
          %p359 = pneg %p72
        $region50: #{tpu_custom_call.1} parent=47 // pred_check_branch
          %361 = sbr.rel (%p359) target = $region52
        $region51: #{tpu_custom_call.1} parent=47 // pred_region
          %362 = dma.done %s355, 256
        $region52: #{tpu_custom_call.1} parent=47 // pred_fallthru
          _
        %s363 = sand.u32 %s30, 1
        %s364 = scalar_lea.sflag [#allocation8], %s363
        %s365 = sand.u32 %s87, 1
        %s366 = smul.addr %s365, 128
        %s367 = scalar_lea.vmem [#allocation7], %s366
        // Predicated region
        $region53: #{tpu_custom_call.1} parent=47 // pred_check
          %p368 = pneg %p100
        $region54: #{tpu_custom_call.1} parent=47 // pred_check_branch
          %370 = sbr.rel (%p368) target = $region56
        $region55: #{tpu_custom_call.1} parent=47 // pred_region
          %371 = dma.done %s364, 2048
        $region56: #{tpu_custom_call.1} parent=47 // pred_fallthru
          _
        // Predicated region
        $region57: #{tpu_custom_call.1} parent=47 // pred_check
          %p372 = pneg %p121
        $region58: #{tpu_custom_call.1} parent=47 // pred_check_branch
          %374 = sbr.rel (%p372) target = $region60
        $region59: #{tpu_custom_call.1} parent=47 // pred_region
          %375 = dma.done [#allocation8], 16
        $region60: #{tpu_custom_call.1} parent=47 // pred_fallthru
          _
        // Predicated region
        $region61: #{tpu_custom_call.1} parent=47 // pred_check
          %p376 = pneg %p142
        $region62: #{tpu_custom_call.1} parent=47 // pred_check_branch
          %378 = sbr.rel (%p376) target = $region64
        $region63: #{tpu_custom_call.1} parent=47 // pred_region
          %379 = dma.done [#allocation11], 16
        $region64: #{tpu_custom_call.1} parent=47 // pred_fallthru
          _
        // Predicated region
        $region65: #{tpu_custom_call.1} parent=47 // pred_check
          %p380 = pneg %p163
        $region66: #{tpu_custom_call.1} parent=47 // pred_check_branch
          %382 = sbr.rel (%p380) target = $region68
        $region67: #{tpu_custom_call.1} parent=47 // pred_region
          %383 = dma.done [#allocation11], 2048
        $region68: #{tpu_custom_call.1} parent=47 // pred_fallthru
          _
        // Predicated region
        $region69: #{tpu_custom_call.1} parent=47 // pred_check
          %p384 = pneg %p184
        $region70: #{tpu_custom_call.1} parent=47 // pred_check_branch
          %386 = sbr.rel (%p384) target = $region72
        $region71: #{tpu_custom_call.1} parent=47 // pred_region
          %387 = dma.done [#allocation14], 16
        $region72: #{tpu_custom_call.1} parent=47 // pred_fallthru
          _
        %s388 = sand.u32 %s59, 1
        %s389 = scalar_lea.sflag [#allocation5], %s388
        %s390 = sand.u32 %s59, 1
        %s391 = smul.addr %s390, 16
        %s392 = scalar_lea.vmem [#allocation4], %s391
        %p393 = pneg %p72
        %p394 = pneg %p69
        %s395 = sand.u32 %s30, 1
        %s396 = scalar_lea.sflag [#allocation8], %s395
        %s397 = sand.u32 %s87, 1
        %s398 = smul.addr %s397, 128
        %s399 = scalar_lea.vmem [#allocation7], %s398
        %p400 = pneg %p100
        %p401 = pneg %p97
        %p402 = pneg %p121
        %p403 = pneg %p118
        %p404 = pneg %p142
        %p405 = pneg %p139
        %p406 = pneg %p163
        %p407 = pneg %p160
        %p408 = pneg %p184
        %p409 = pneg %p181
        %p410 = pneg %p205
        %p411 = pneg %p202
        %p412 = pneg %p233
        %p413 = pneg %p230
        %s414 = sand.u32 %s220, 1
        %s415 = scalar_lea.sflag [#allocation6], %s414
        %s416 = sand.u32 %s220, 1
        %s417 = smul.addr %s416, 16
        %s418 = scalar_lea.vmem [#allocation15], %s417
        %s419 = smul.u32 2, %s35
        %s420 = smul.u32 16, %s37
        %s421 = smul.u32 2, %s35
        %p422 = scmp.eq.s32.totalorder %s37, 0
        // Predicated region
        $region73: #{tpu_custom_call.1} parent=47 // pred_check
          %p423 = pneg %p422
        $region74: #{tpu_custom_call.1} parent=47 // pred_check_branch
          %425 = sbr.rel (%p423) target = $region76
        $region75: #{tpu_custom_call.1} parent=47 // pred_region
          %426 = vst [vmem:[#allocation2] sm:$0xff] 0.0
          %427 = vst [vmem:[#allocation2 + $0x8] sm:$0xff] 0.0
        $region76: #{tpu_custom_call.1} parent=47 // pred_fallthru
          _
        %v428 = vld [vmem:[%s358] sm:$0xff]
        %v429 = vld [vmem:[%s358 + $0x8] sm:$0xff]
        %v430 = vld [vmem:[#allocation2] sm:$0xff]
        %v431 = vld [vmem:[#allocation2 + $0x8] sm:$0xff]
        %v432 = vld [vmem:[%s367] sm:$0xff]
        %v433 = vld [vmem:[%s367 + $0x8] sm:$0xff]
        %v434 = vld [vmem:[%s367 + $0x10] sm:$0xff]
        %v435 = vld [vmem:[%s367 + $0x18] sm:$0xff]
        %v436 = vld [vmem:[%s367 + $0x20] sm:$0xff]
        %v437 = vld [vmem:[%s367 + $0x28] sm:$0xff]
        %v438 = vld [vmem:[%s367 + $0x30] sm:$0xff]
        %v439 = vld [vmem:[%s367 + $0x38] sm:$0xff]
        %v440 = vld [vmem:[%s367 + $0x40] sm:$0xff]
        %v441 = vld [vmem:[%s367 + $0x48] sm:$0xff]
        %v442 = vld [vmem:[%s367 + $0x50] sm:$0xff]
        %v443 = vld [vmem:[%s367 + $0x58] sm:$0xff]
        %v444 = vld [vmem:[%s367 + $0x60] sm:$0xff]
        %v445 = vld [vmem:[%s367 + $0x68] sm:$0xff]
        %v446 = vld [vmem:[%s367 + $0x70] sm:$0xff]
        %v447 = vld [vmem:[%s367 + $0x78] sm:$0xff]
        %448 = vmatprep.subr.mxu0 0.0
        %449 = vmatpush1.msra.mxu0 %v447
        %450 = vmatprep.subr.mxu0 0.0
        %451 = vmatpush1.msra.mxu0 %v446
        %452 = vmatprep.subr.mxu0 0.0
        %453 = vmatpush1.msra.mxu0 %v445
        %454 = vmatprep.subr.mxu0 0.0
        %455 = vmatpush1.msra.mxu0 %v444
        %456 = vmatprep.subr.mxu0 0.0
        %457 = vmatpush1.msra.mxu0 %v443
        %458 = vmatprep.subr.mxu0 0.0
        %459 = vmatpush1.msra.mxu0 %v442
        %460 = vmatprep.subr.mxu0 0.0
        %461 = vmatpush1.msra.mxu0 %v441
        %462 = vmatprep.subr.mxu0 0.0
        %463 = vmatpush1.msra.mxu0 %v440
        %464 = vmatprep.subr.mxu0 0.0
        %465 = vmatpush1.msra.mxu0 %v439
        %466 = vmatprep.subr.mxu0 0.0
        %467 = vmatpush1.msra.mxu0 %v438
        %468 = vmatprep.subr.mxu0 0.0
        %469 = vmatpush1.msra.mxu0 %v437
        %470 = vmatprep.subr.mxu0 0.0
        %471 = vmatpush1.msra.mxu0 %v436
        %472 = vmatprep.subr.mxu0 0.0
        %473 = vmatpush1.msra.mxu0 %v435
        %474 = vmatprep.subr.mxu0 0.0
        %475 = vmatpush1.msra.mxu0 %v434
        %476 = vmatprep.subr.mxu0 0.0
        %477 = vmatpush1.msra.mxu0 %v433
        %478 = vmatprep.subr.mxu0 0.0
        %479 = vmatpush1.msra.mxu0 %v432
        %480 = vmatprep.subr.mxu0 0.0
        %481 = vmatpush2.msra.mxu0 0.0
        %482 = vmatprep.subr.mxu0 0.0
        %483 = vmatpush2.msra.mxu0 0.0
        %484 = vmatprep.subr.mxu0 0.0
        %485 = vmatpush2.msra.mxu0 0.0
        %486 = vmatprep.subr.mxu0 0.0
        %487 = vmatpush2.msra.mxu0 0.0
        %488 = vmatprep.subr.mxu0 0.0
        %489 = vmatpush2.msra.mxu0 0.0
        %490 = vmatprep.subr.mxu0 0.0
        %491 = vmatpush2.msra.mxu0 0.0
        %492 = vmatprep.subr.mxu0 0.0
        %493 = vmatpush2.msra.mxu0 0.0
        %494 = vmatprep.subr.mxu0 0.0
        %495 = vmatpush2.msra.mxu0 0.0
        %496 = vmatprep.subr.mxu0 0.0
        %497 = vmatpush2.msra.mxu0 0.0
        %498 = vmatprep.subr.mxu0 0.0
        %499 = vmatpush2.msra.mxu0 0.0
        %500 = vmatprep.subr.mxu0 0.0
        %501 = vmatpush2.msra.mxu0 0.0
        %502 = vmatprep.subr.mxu0 0.0
        %503 = vmatpush2.msra.mxu0 0.0
        %504 = vmatprep.subr.mxu0 0.0
        %505 = vmatpush2.msra.mxu0 0.0
        %506 = vmatprep.subr.mxu0 0.0
        %507 = vmatpush2.msra.mxu0 0.0
        %508 = vmatprep.subr.mxu0 0.0
        %509 = vmatpush2.msra.mxu0 0.0
        %510 = vmatprep.subr.mxu0 0.0
        %511 = vmatpush2.msra.mxu0 0.0
        %512 = vmatprep.mubr.f32.mxu0 0.0
        %513 = vmatmul.mubr.f32.gmra.mxu0 %v428
        %v514 = vpop.f32.mrf.mxu0
        %v515 = vadd.f32 0.0, %v514
        %v516 = vpop.f32.mrf.mxu0
        %517 = vmatprep.mubr.f32.mxu0 0.0
        %518 = vmatmul.mubr.f32.gmra.mxu0 %v429
        %v519 = vpop.f32.mrf.mxu0
        %v520 = vadd.f32 0.0, %v519
        %v521 = vpop.f32.mrf.mxu0
        %522 = vdwg.mxu0
        %v523 = vadd.f32 %v430, %v515
        %v524 = vadd.f32 %v431, %v520
        %525 = vst [vmem:[#allocation2] sm:$0xff] %v523
        %526 = vst [vmem:[#allocation2 + $0x8] sm:$0xff] %v524
        %p527 = scmp.eq.s32.totalorder %s37, 12
        // Predicated region
        $region77: #{tpu_custom_call.1} parent=47 // pred_check
          %p528 = pneg %p527
        $region78: #{tpu_custom_call.1} parent=47 // pred_check_branch
          %530 = sbr.rel (%p528) target = $region80
        $region79: #{tpu_custom_call.1} parent=47 // pred_region
          %p531 = scmp.eq.s32.totalorder %s36, 0
          // Predicated region
          $region81: #{tpu_custom_call.1} parent=79 // pred_check
            %p532 = pneg %p531
          $region82: #{tpu_custom_call.1} parent=79 // pred_check_branch
            %534 = sbr.rel (%p532) target = $region84
          $region83: #{tpu_custom_call.1} parent=79 // pred_region
            %v535 = vld [vmem:[#allocation2] sm:$0xff]
            %v536 = vld [vmem:[#allocation2 + $0x8] sm:$0xff]
            %v537 = vld [vmem:[#allocation9] sm:$0x1]
            %v539 = vlaneseq
            %v540 = vshrl.u32 %v539, 7
            %v541 = vsub.s32 0, %v540
            %v542 = vrot.slane %v537, %v541
            %v544 = vadd.f32 %v535, %v542
            %v545 = vadd.f32 %v536, %v542
            %546 = vst [vmem:[%s418] sm:$0xff] %v544
            %547 = vst [vmem:[%s418 + $0x8] sm:$0xff] %v545
          $region84: #{tpu_custom_call.1} parent=79 // pred_fallthru
            _
          %p548 = scmp.eq.s32.totalorder %s36, 1
          // Predicated region
          $region85: #{tpu_custom_call.1} parent=79 // pred_check
            %p549 = pneg %p548
          $region86: #{tpu_custom_call.1} parent=79 // pred_check_branch
            %551 = sbr.rel (%p549) target = $region88
          $region87: #{tpu_custom_call.1} parent=79 // pred_region
            %v552 = vld [vmem:[#allocation2] sm:$0xff]
            %v553 = vld [vmem:[#allocation2 + $0x8] sm:$0xff]
            %v554 = vld [vmem:[#allocation10] sm:$0x1]
            %v556 = vlaneseq
            %v557 = vshrl.u32 %v556, 7
            %v558 = vsub.s32 0, %v557
            %v559 = vrot.slane %v554, %v558
            %v561 = vadd.f32 %v552, %v559
            %v562 = vadd.f32 %v553, %v559
            %v563 = vmax.f32 %v561, 0.0
            %v564 = vmax.f32 %v562, 0.0
            %v565 = vld [vmem:[#allocation12] sm:$0xff]
            %v566 = vld [vmem:[#allocation12 + $0x8] sm:$0xff]
            %v567 = vld [vmem:[#allocation12 + $0x10] sm:$0xff]
            %v568 = vld [vmem:[#allocation12 + $0x18] sm:$0xff]
            %v569 = vld [vmem:[#allocation12 + $0x20] sm:$0xff]
            %v570 = vld [vmem:[#allocation12 + $0x28] sm:$0xff]
            %v571 = vld [vmem:[#allocation12 + $0x30] sm:$0xff]
            %v572 = vld [vmem:[#allocation12 + $0x38] sm:$0xff]
            %v573 = vld [vmem:[#allocation12 + $0x40] sm:$0xff]
            %v574 = vld [vmem:[#allocation12 + $0x48] sm:$0xff]
            %v575 = vld [vmem:[#allocation12 + $0x50] sm:$0xff]
            %v576 = vld [vmem:[#allocation12 + $0x58] sm:$0xff]
            %v577 = vld [vmem:[#allocation12 + $0x60] sm:$0xff]
            %v578 = vld [vmem:[#allocation12 + $0x68] sm:$0xff]
            %v579 = vld [vmem:[#allocation12 + $0x70] sm:$0xff]
            %v580 = vld [vmem:[#allocation12 + $0x78] sm:$0xff]
            %581 = vmatprep.subr.mxu0 0.0
            %582 = vmatpush1.msra.mxu0 %v580
            %583 = vmatprep.subr.mxu0 0.0
            %584 = vmatpush1.msra.mxu0 %v579
            %585 = vmatprep.subr.mxu0 0.0
            %586 = vmatpush1.msra.mxu0 %v578
            %587 = vmatprep.subr.mxu0 0.0
            %588 = vmatpush1.msra.mxu0 %v577
            %589 = vmatprep.subr.mxu0 0.0
            %590 = vmatpush1.msra.mxu0 %v576
            %591 = vmatprep.subr.mxu0 0.0
            %592 = vmatpush1.msra.mxu0 %v575
            %593 = vmatprep.subr.mxu0 0.0
            %594 = vmatpush1.msra.mxu0 %v574
            %595 = vmatprep.subr.mxu0 0.0
            %596 = vmatpush1.msra.mxu0 %v573
            %597 = vmatprep.subr.mxu0 0.0
            %598 = vmatpush1.msra.mxu0 %v572
            %599 = vmatprep.subr.mxu0 0.0
            %600 = vmatpush1.msra.mxu0 %v571
            %601 = vmatprep.subr.mxu0 0.0
            %602 = vmatpush1.msra.mxu0 %v570
            %603 = vmatprep.subr.mxu0 0.0
            %604 = vmatpush1.msra.mxu0 %v569
            %605 = vmatprep.subr.mxu0 0.0
            %606 = vmatpush1.msra.mxu0 %v568
            %607 = vmatprep.subr.mxu0 0.0
            %608 = vmatpush1.msra.mxu0 %v567
            %609 = vmatprep.subr.mxu0 0.0
            %610 = vmatpush1.msra.mxu0 %v566
            %611 = vmatprep.subr.mxu0 0.0
            %612 = vmatpush1.msra.mxu0 %v565
            %613 = vmatprep.subr.mxu0 0.0
            %614 = vmatpush2.msra.mxu0 0.0
            %615 = vmatprep.subr.mxu0 0.0
            %616 = vmatpush2.msra.mxu0 0.0
            %617 = vmatprep.subr.mxu0 0.0
            %618 = vmatpush2.msra.mxu0 0.0
            %619 = vmatprep.subr.mxu0 0.0
            %620 = vmatpush2.msra.mxu0 0.0
            %621 = vmatprep.subr.mxu0 0.0
            %622 = vmatpush2.msra.mxu0 0.0
            %623 = vmatprep.subr.mxu0 0.0
            %624 = vmatpush2.msra.mxu0 0.0
            %625 = vmatprep.subr.mxu0 0.0
            %626 = vmatpush2.msra.mxu0 0.0
            %627 = vmatprep.subr.mxu0 0.0
            %628 = vmatpush2.msra.mxu0 0.0
            %629 = vmatprep.subr.mxu0 0.0
            %630 = vmatpush2.msra.mxu0 0.0
            %631 = vmatprep.subr.mxu0 0.0
            %632 = vmatpush2.msra.mxu0 0.0
            %633 = vmatprep.subr.mxu0 0.0
            %634 = vmatpush2.msra.mxu0 0.0
            %635 = vmatprep.subr.mxu0 0.0
            %636 = vmatpush2.msra.mxu0 0.0
            %637 = vmatprep.subr.mxu0 0.0
            %638 = vmatpush2.msra.mxu0 0.0
            %639 = vmatprep.subr.mxu0 0.0
            %640 = vmatpush2.msra.mxu0 0.0
            %641 = vmatprep.subr.mxu0 0.0
            %642 = vmatpush2.msra.mxu0 0.0
            %643 = vmatprep.subr.mxu0 0.0
            %644 = vmatpush2.msra.mxu0 0.0
            %645 = vmatprep.mubr.f32.mxu0 0.0
            %646 = vmatmul.mubr.f32.gmra.mxu0 %v563
            %v647 = vpop.f32.mrf.mxu0
            %v648 = vadd.f32 0.0, %v647
            %v649 = vpop.f32.mrf.mxu0
            %650 = vmatprep.mubr.f32.mxu0 0.0
            %651 = vmatmul.mubr.f32.gmra.mxu0 %v564
            %v652 = vpop.f32.mrf.mxu0
            %v653 = vadd.f32 0.0, %v652
            %v654 = vpop.f32.mrf.mxu0
            %655 = vdwg.mxu0
            %s656 = sld [smem:[#allocation3]]
            %v657 = vstv %s656
            %v658 = vmul.f32 %v657, %v648
            %v659 = vmul.f32 %v657, %v653
            %v660 = vld [vmem:[#allocation13] sm:$0x1]
            %v662 = vlaneseq
            %v663 = vshrl.u32 %v662, 7
            %v664 = vsub.s32 0, %v663
            %v665 = vrot.slane %v660, %v664
            %v667 = vadd.f32 %v658, %v665
            %v668 = vadd.f32 %v659, %v665
            %669 = vst [vmem:[%s418] sm:$0xff] %v667
            %670 = vst [vmem:[%s418 + $0x8] sm:$0xff] %v668
          $region88: #{tpu_custom_call.1} parent=79 // pred_fallthru
            _
        $region80: #{tpu_custom_call.1} parent=47 // pred_fallthru
          _
        %s671 = sand.u32 %s220, 1
        %s672 = scalar_lea.sflag [#allocation6], %s671
        %s673 = sand.u32 %s220, 1
        %s674 = smul.addr %s673, 16
        %s675 = scalar_lea.vmem [#allocation15], %s674
        // Predicated region
        $region89: #{tpu_custom_call.1} parent=47 // pred_check
          %p676 = pneg %p230
        $region90: #{tpu_custom_call.1} parent=47 // pred_check_branch
          %678 = sbr.rel (%p676) target = $region92
        $region91: #{tpu_custom_call.1} parent=47 // pred_region
          %s679 = smul.u32 2, %s35
          %s681 = ssub.s32 256, 256
          %682 = vsyncadd %s672, %s681
          %s683 = smul.addr %s679, 2
          %s684 = sadd.s32 %s36, %s683
          %s685 = smul.addr %s684, 128
          %s686 = scalar_lea.hbm %s7, %s685
          %s687 = sshll.u32 %s675, 4
          %s688 = int_to_ptr.vmem [resolvable:$true] %s687
          %693 = dma.vmem_to_hbm [thread:$0]  %s688, 256, %s686, %s672, 128, 256, 8
        $region92: #{tpu_custom_call.1} parent=47 // pred_fallthru
          _
      $region48: #{tpu_custom_call.1} parent=5 // pred_fallthru
        _
      %p694 = scmp.le.s32.totalorder 2, %s25
      // Predicated region
      $region93: #{tpu_custom_call.1} parent=5 // pred_check
        %p695 = pneg %p694
      $region94: #{tpu_custom_call.1} parent=5 // pred_check_branch
        %697 = sbr.rel (%p695) target = $region96
      $region95: #{tpu_custom_call.1} parent=5 // pred_region
        %s698 = ssub.s32 %s25, 2
        // Predicated region
        $region97: #{tpu_custom_call.1} parent=95 // pred_check
          %p699 = pneg %p236
        $region98: #{tpu_custom_call.1} parent=95 // pred_check_branch
          %701 = sbr.rel (%p699) target = $region100
        $region99: #{tpu_custom_call.1} parent=95 // pred_region
          %s702 = sand.u32 %s221, 1
          %s703 = scalar_lea.sflag [#allocation6], %s702
          %s704 = sand.u32 %s221, 1
          %s705 = smul.addr %s704, 16
          %s706 = scalar_lea.vmem [#allocation15], %s705
          %707 = dma.done %s703, 256
        $region100: #{tpu_custom_call.1} parent=95 // pred_fallthru
          _
      $region96: #{tpu_custom_call.1} parent=5 // pred_fallthru
        _
    $region6: #{tpu_custom_call.1} parent=1 // loop_footer
      %s29 = sadd.s32 1, %s25
    $region7: #{tpu_custom_call.1} parent=1 // loop_footer_branch
      %24 = sbr.rel target = $region3
    $region8: #{tpu_custom_call.1} parent=1 // loop_exit
      _
    %708 = vsyncpa [#allocation5], 1
    %s709 = scalar_lea.sflag [#allocation5], 1
    %710 = vsyncpa %s709, 1
    %711 = vsyncpa [#allocation8], 1
    %s712 = scalar_lea.sflag [#allocation8], 1
    %713 = vsyncpa %s712, 1
    %714 = vsyncpa [#allocation11], 1
    %715 = vsyncpa [#allocation14], 1
    %716 = vsyncpa [#allocation6], 1
    %s717 = scalar_lea.sflag [#allocation6], 1
    %718 = vsyncpa %s717, 1

</llo_original>
